<compile_context>
chip_gen: v7x
topology: tpu7x:2x2x1
jax: 0.10.0
libtpu: 0.0.40
codegen_flags: <defaults>
</compile_context>

<pallas_src>
import math
import functools

import jax
import jax.numpy as jnp
from jax.experimental import pallas as pl
from jax.experimental.pallas import tpu as pltpu


# ---------------------------------------------------------------------------
# Tiled linear kernel: out = x @ W + b   (used for c_attn and c_proj)
# x, W are bf16 in HBM; accumulation and bias add in f32.
# ---------------------------------------------------------------------------
def _linear_kernel(x_ref, w_ref, b_ref, o_ref, acc_ref):
    k = pl.program_id(2)

    @pl.when(k == 0)
    def _():
        acc_ref[...] = jnp.zeros_like(acc_ref)

    acc_ref[...] += jnp.dot(x_ref[...], w_ref[...],
                            preferred_element_type=jnp.float32)

    @pl.when(k == pl.num_programs(2) - 1)
    def _():
        o_ref[...] = (acc_ref[...] + b_ref[...]).astype(o_ref.dtype)


def _pick_tile(dim, preferred, granule):
    """Largest tile <= `preferred` that divides `dim` and is a multiple of
    `granule`; falls back to the full dimension (full-extent blocks are always
    legal regardless of the (8, 128) rule)."""
    if dim <= preferred:
        return dim
    t = (preferred // granule) * granule
    while t >= granule:
        if dim % t == 0:
            return t
        t -= granule
    return dim


def _linear(x2d, w, b, *, out_dtype, tm=256, tn=256, tk=512):
    """x2d: (M, K) bf16, w: (K, N) bf16, b: (N,) f32  ->  (M, N) out_dtype."""
    M, K = x2d.shape
    _, N = w.shape
    tm = _pick_tile(M, tm, 8)      # sublane dim of x / out
    tn = _pick_tile(N, tn, 128)    # lane dim of W / out
    tk = _pick_tile(K, tk, 128)    # lane dim of x, sublane dim of W
    b2 = b.reshape(1, N).astype(jnp.float32)

    return pl.pallas_call(
        _linear_kernel,
        out_shape=jax.ShapeDtypeStruct((M, N), out_dtype),
        grid_spec=pltpu.PrefetchScalarGridSpec(
            num_scalar_prefetch=0,
            grid=(M // tm, N // tn, K // tk),
            in_specs=[
                pl.BlockSpec((tm, tk), lambda i, j, k: (i, k)),    # x tile (bf16)
                pl.BlockSpec((tk, tn), lambda i, j, k: (k, j)),    # W tile (bf16)
                pl.BlockSpec((1, tn), lambda i, j, k: (0, j)),     # bias tile (f32)
            ],
            out_specs=pl.BlockSpec((tm, tn), lambda i, j, k: (i, j)),
            scratch_shapes=[pltpu.VMEM((tm, tn), jnp.float32)],
        ),
        compiler_params=pltpu.CompilerParams(
            dimension_semantics=("parallel", "parallel", "arbitrary")),
    )(x2d, w, b2)


# ---------------------------------------------------------------------------
# Flash attention kernel (causal, online softmax, packed-qkv input,
# triangular kv loop via scalar prefetch, lane-dense (B, T, C) output)
# ---------------------------------------------------------------------------
def _flash_kernel(qi_ref, ki_ref, q_ref, k_ref, v_ref, o_ref,
                  m_sc, l_sc, acc_sc, *, n_head, head_dim, block):
    t = pl.program_id(1)
    qi = qi_ref[t]
    ki = ki_ref[t]

    @pl.when(ki == 0)
    def _():
        m_sc[...] = jnp.full(m_sc.shape, -jnp.inf, dtype=jnp.float32)
        l_sc[...] = jnp.zeros_like(l_sc)
        acc_sc[...] = jnp.zeros_like(acc_sc)

    def online_softmax_step(apply_mask):
        q = q_ref[0]                 # (blk, C) bf16; 1/sqrt(hd) folded into W_q
        k = k_ref[0]                 # (blk, C) bf16
        v = v_ref[0]                 # (blk, C) bf16
        if apply_mask:
            # Only the diagonal tile needs a mask; block_q == block_k so the
            # qi*blk / ki*blk offsets cancel and local coordinates suffice.
            row = jax.lax.broadcasted_iota(jnp.int32, (block, block), 0)
            col = jax.lax.broadcasted_iota(jnp.int32, (block, block), 1)
            causal = col <= row
        for h in range(n_head):
            cols = slice(h * head_dim, (h + 1) * head_dim)
            # (blk, hd) x (blk, hd) contracted over hd -> (blk, blk), f32 acc.
            s = jax.lax.dot_general(q[:, cols], k[:, cols],
                                    (((1,), (1,)), ((), ())),
                                    preferred_element_type=jnp.float32)
            if apply_mask:
                s = jnp.where(causal, s, -jnp.inf)
            m_prev = m_sc[:, h:h + 1]                         # (blk, 1) f32
            m_new = jnp.maximum(m_prev, jnp.max(s, axis=-1, keepdims=True))
            alpha = jnp.exp(m_prev - m_new)
            p = jnp.exp(s - m_new)                            # (blk, blk) f32
            l_sc[:, h:h + 1] = alpha * l_sc[:, h:h + 1] + jnp.sum(
                p, axis=-1, keepdims=True)
            acc_sc[:, cols] = alpha * acc_sc[:, cols] + jnp.dot(
                p.astype(jnp.bfloat16), v[:, cols],
                preferred_element_type=jnp.float32)
            m_sc[:, h:h + 1] = m_new

    # Strictly-below-diagonal tiles: no mask work at all.
    @pl.when(ki < qi)
    def _():
        online_softmax_step(apply_mask=False)

    # Diagonal tile: local causal mask, then finalize this q tile.
    @pl.when(ki == qi)
    def _():
        online_softmax_step(apply_mask=True)
        inv_l = pl.reciprocal(l_sc[...], approx=True)         # (blk, H), EUP slot
        for h in range(n_head):
            cols = slice(h * head_dim, (h + 1) * head_dim)
            o_ref[0, :, cols] = (acc_sc[:, cols] * inv_l[:, h:h + 1]
                                 ).astype(o_ref.dtype)


def _flash_block(T):
    if T % 256 == 0 and T >= 512:
        return 256
    if T % 128 == 0:
        return 128
    if T <= 128:
        return T           # single tile along the sequence
    return 128             # pad T up to a multiple of 128


def _flash_attention(qkv, *, n_head):
    """qkv: (B, T, 3C) bf16 (packed q|k|v along the last axis) -> (B, T, C) bf16.

    q/k/v are read straight out of the packed c_attn output (no HBM transposes);
    the output is written directly in (B, T, C) layout (lane-dense).  Only the
    lower-triangular (qi, ki) tile pairs are visited, via scalar prefetch.
    For the best input-block layout C (= n_embd) should be a multiple of 128
    (true for common GPT configs).
    """
    B, T, C3 = qkv.shape
    C = C3 // 3
    hd = C // n_head

    blk = _flash_block(T)
    T_pad = ((T + blk - 1) // blk) * blk
    if T_pad != T:
        # Zero-pad the sequence: causality keeps padded keys out of every real
        # query row; padded query rows are sliced off below.
        qkv = jnp.pad(qkv, ((0, 0), (0, T_pad - T), (0, 0)))
    nq = T_pad // blk

    # Flattened lower-triangular (qi, ki) enumeration -> no wasted grid steps.
    qi_list, ki_list = [], []
    for q_i in range(nq):
        for k_i in range(q_i + 1):
            qi_list.append(q_i)
            ki_list.append(k_i)
    qi_idx = jnp.asarray(qi_list, dtype=jnp.int32)
    ki_idx = jnp.asarray(ki_list, dtype=jnp.int32)
    n_steps = len(qi_list)

    kernel = functools.partial(_flash_kernel, n_head=n_head, head_dim=hd,
                               block=blk)

    out = pl.pallas_call(
        kernel,
        out_shape=jax.ShapeDtypeStruct((B, T_pad, C), jnp.bfloat16),
        grid_spec=pltpu.PrefetchScalarGridSpec(
            num_scalar_prefetch=2,
            grid=(B, n_steps),
            in_specs=[
                # q / k / v thirds of the same packed qkv array.
                pl.BlockSpec((1, blk, C), lambda b, t, qi, ki: (b, qi[t], 0)),
                pl.BlockSpec((1, blk, C), lambda b, t, qi, ki: (b, ki[t], 1)),
                pl.BlockSpec((1, blk, C), lambda b, t, qi, ki: (b, ki[t], 2)),
            ],
            out_specs=pl.BlockSpec((1, blk, C),
                                   lambda b, t, qi, ki: (b, qi[t], 0)),
            scratch_shapes=[
                pltpu.VMEM((blk, n_head), jnp.float32),   # running max m
                pltpu.VMEM((blk, n_head), jnp.float32),   # running denom l
                pltpu.VMEM((blk, C), jnp.float32),        # output accumulator
            ],
        ),
        compiler_params=pltpu.CompilerParams(
            dimension_semantics=("parallel", "arbitrary")),
    )(qi_idx, ki_idx, qkv, qkv, qkv)

    return out[:, :T] if T_pad != T else out


# ---------------------------------------------------------------------------
# Full CausalSelfAttention forward
# ---------------------------------------------------------------------------
def causal_self_attention(x, w_qkv, b_qkv, w_proj, b_proj, *, n_head: int):
    """x: (B, T, C) f32.  Weights stored (in, out).  Returns (B, T, C) f32."""
    B, T, C = x.shape
    assert C % n_head == 0
    hd = C // n_head
    sm_scale = 1.0 / math.sqrt(hd)

    # Fold the softmax scale into the q third of the c_attn parameters (f32,
    # one-time) so the flash kernel never rescales q inside its kv loop.
    w_qkv = w_qkv.at[:, :C].multiply(sm_scale)
    b_qkv = b_qkv.at[:C].multiply(sm_scale)

    # bf16 operands in HBM (the MXU consumes bf16 anyway) -> half the DMA bytes.
    x_bf = x.astype(jnp.bfloat16)
    w_qkv_bf = w_qkv.astype(jnp.bfloat16)
    w_proj_bf = w_proj.astype(jnp.bfloat16)

    # c_attn: (B*T, C) @ (C, 3C) + b  ->  packed qkv kept bf16 in HBM.
    qkv = _linear(x_bf.reshape(B * T, C), w_qkv_bf, b_qkv,
                  out_dtype=jnp.bfloat16)
    qkv = qkv.reshape(B, T, 3 * C)              # free reshape, no transpose

    # TODO(synk): attn_dropout omitted (eval mode, p=0).
    y = _flash_attention(qkv, n_head=n_head)    # (B, T, C) bf16, no transposes

    # c_proj: (B*T, C) @ (C, C) + b
    # TODO(synk): resid_dropout omitted (eval mode, p=0).
    out = _linear(y.reshape(B * T, C), w_proj_bf, b_proj, out_dtype=x.dtype)
    return out.reshape(B, T, C)


# ---------------------------------------------------------------------------
# Pure-JAX reference (mirrors the PyTorch forward, eval mode, f32 throughout)
# ---------------------------------------------------------------------------
def _reference(x, w_qkv, b_qkv, w_proj, b_proj, n_head):
    B, T, C = x.shape
    hd = C // n_head
    qkv = x @ w_qkv + b_qkv
    q, k, v = jnp.split(qkv, 3, axis=2)
    q = q.reshape(B, T, n_head, hd).transpose(0, 2, 1, 3)
    k = k.reshape(B, T, n_head, hd).transpose(0, 2, 1, 3)
    v = v.reshape(B, T, n_head, hd).transpose(0, 2, 1, 3)
    att = jnp.einsum("bhqd,bhkd->bhqk", q, k) / math.sqrt(hd)
    mask = jnp.tril(jnp.ones((T, T), dtype=bool))
    att = jnp.where(mask, att, -jnp.inf)
    att = jax.nn.softmax(att, axis=-1)
    y = jnp.einsum("bhqk,bhkd->bhqd", att, v)
    y = y.transpose(0, 2, 1, 3).reshape(B, T, C)
    return y @ w_proj + b_proj


if __name__ == "__main__":
    # Small config consistent with the module (n_embd % n_head == 0); C=128 and
    # T=256 keep everything 128-aligned and exercise multi-tile q/kv iteration.
    B, T, C, n_head = 2, 256, 128, 4

    key = jax.random.PRNGKey(0)
    kx, k1, k2, k3, k4 = jax.random.split(key, 5)

    x = jax.random.normal(kx, (B, T, C), dtype=jnp.float32)
    # Deterministic synthetic parameters, stored as (in, out).
    w_qkv = jax.random.normal(k1, (C, 3 * C), dtype=jnp.float32) * 0.02
    b_qkv = jax.random.normal(k2, (3 * C,), dtype=jnp.float32) * 0.02
    w_proj = jax.random.normal(k3, (C, C), dtype=jnp.float32) * 0.02
    b_proj = jax.random.normal(k4, (C,), dtype=jnp.float32) * 0.02

    out = causal_self_attention(x, w_qkv, b_qkv, w_proj, b_proj, n_head=n_head)
    out = jax.block_until_ready(out)

    ref = _reference(x, w_qkv, b_qkv, w_proj, b_proj, n_head)
    assert out.shape == (B, T, C)
    max_err = float(jnp.max(jnp.abs(out - ref)))
    # bf16 HBM operands + approx reciprocal -> looser tolerance vs the f32 ref.
    assert jnp.allclose(out, ref, atol=2e-2, rtol=2e-2), (
        f"mismatch vs reference (max abs err {max_err})")

    print("KERNEL_OK")
</pallas_src>

<mosaic_0001>
module attributes {stable_mosaic.version = 11 : i64} {
  func.func @_linear_kernel(%arg0: i32, %arg1: i32, %arg2: i32, %arg3: memref<256x128xbf16, #tpu.memory_space<vmem>>, %arg4: memref<128x128xbf16, #tpu.memory_space<vmem>>, %arg5: memref<1x128xf32, #tpu.memory_space<vmem>>, %arg6: memref<256x128xbf16, #tpu.memory_space<vmem>>, %arg7: memref<256x128xf32, #tpu.memory_space<vmem>>) attributes {dimension_semantics = [#tpu.dimension_semantics<parallel>, #tpu.dimension_semantics<parallel>, #tpu.dimension_semantics<arbitrary>], iteration_bounds = array<i64: 2, 3, 1>, scalar_prefetch = 0 : i64, scratch_operands = 1 : i64, tpu.core_type = #tpu.core_type<tc>, window_params = [{transform_indices = @transform_0, window_bounds = array<i64: 256, 128>}, {transform_indices = @transform_1, window_bounds = array<i64: 128, 128>}, {transform_indices = @transform_2, window_bounds = array<i64: 1, 128>}, {transform_indices = @transform_3, window_bounds = array<i64: 256, 128>}]} {
    %c0_i32 = arith.constant 0 : i32
    %0 = arith.cmpi eq, %arg2, %c0_i32 : i32
    %1 = arith.extui %0 : i1 to i32
    %c0_i32_0 = arith.constant 0 : i32
    %2 = arith.cmpi ne, %1, %c0_i32_0 : i32
    scf.if %2 {
      %cst_10 = arith.constant 0.000000e+00 : f32
      %12 = vector.broadcast %cst_10 : f32 to vector<256x128xf32>
      %c0_11 = arith.constant 0 : index
      %c0_12 = arith.constant 0 : index
      %13 = vector.load %arg7[%c0_11, %c0_12] : memref<256x128xf32, #tpu.memory_space<vmem>>, vector<256x128xf32>
      tpu.vector_store %arg7[%c0_11, %c0_12], %12 {strides = array<i32>} : memref<256x128xf32, #tpu.memory_space<vmem>>, vector<256x128xf32>,
    } else {
    }
    %c0 = arith.constant 0 : index
    %c0_1 = arith.constant 0 : index
    %3 = vector.load %arg7[%c0, %c0_1] : memref<256x128xf32, #tpu.memory_space<vmem>>, vector<256x128xf32>
    %c0_2 = arith.constant 0 : index
    %c0_3 = arith.constant 0 : index
    %4 = vector.load %arg3[%c0_2, %c0_3] : memref<256x128xbf16, #tpu.memory_space<vmem>>, vector<256x128xbf16>
    %c0_4 = arith.constant 0 : index
    %c0_5 = arith.constant 0 : index
    %5 = vector.load %arg4[%c0_4, %c0_5] : memref<128x128xbf16, #tpu.memory_space<vmem>>, vector<128x128xbf16>
    %cst = arith.constant dense<0.000000e+00> : vector<256x128xf32>
    %6 = tpu.matmul %4, %5, %cst {dimension_numbers = #tpu.dot_dimension_numbers<[1], [0], [0], [1], [0, 0, 1, 1], [], []>} : vector<256x128xbf16>, vector<128x128xbf16>, vector<256x128xf32> -> vector<256x128xf32>
    %7 = arith.addf %3, %6 : vector<256x128xf32>
    %c0_6 = arith.constant 0 : index
    %c0_7 = arith.constant 0 : index
    %8 = vector.load %arg7[%c0_6, %c0_7] : memref<256x128xf32, #tpu.memory_space<vmem>>, vector<256x128xf32>
    tpu.vector_store %arg7[%c0_6, %c0_7], %7 {strides = array<i32>} : memref<256x128xf32, #tpu.memory_space<vmem>>, vector<256x128xf32>,
    %c0_i32_8 = arith.constant 0 : i32
    %9 = arith.cmpi eq, %arg2, %c0_i32_8 : i32
    %10 = arith.extui %9 : i1 to i32
    %c0_i32_9 = arith.constant 0 : i32
    %11 = arith.cmpi ne, %10, %c0_i32_9 : i32
    scf.if %11 {
      %c0_10 = arith.constant 0 : index
      %c0_11 = arith.constant 0 : index
      %12 = vector.load %arg7[%c0_10, %c0_11] : memref<256x128xf32, #tpu.memory_space<vmem>>, vector<256x128xf32>
      %c0_12 = arith.constant 0 : index
      %c0_13 = arith.constant 0 : index
      %13 = vector.load %arg5[%c0_12, %c0_13] : memref<1x128xf32, #tpu.memory_space<vmem>>, vector<1x128xf32>
      %14 = vector.broadcast %13 : vector<1x128xf32> to vector<256x128xf32>
      %15 = arith.addf %12, %14 : vector<256x128xf32>
      %16 = arith.truncf %15 : vector<256x128xf32> to vector<256x128xbf16>
      %c0_14 = arith.constant 0 : index
      %c0_15 = arith.constant 0 : index
      %17 = vector.load %arg6[%c0_14, %c0_15] : memref<256x128xbf16, #tpu.memory_space<vmem>>, vector<256x128xbf16>
      tpu.vector_store %arg6[%c0_14, %c0_15], %16 {strides = array<i32>} : memref<256x128xbf16, #tpu.memory_space<vmem>>, vector<256x128xbf16>,
    } else {
    }
    return
  }
  func.func @transform_0(%arg0: i32, %arg1: i32, %arg2: i32) -> (i32, i32) {
    %c0_i32 = arith.constant 0 : i32
    return %arg0, %arg2 : i32, i32
  }
  func.func @transform_1(%arg0: i32, %arg1: i32, %arg2: i32) -> (i32, i32) {
    %c0_i32 = arith.constant 0 : i32
    return %arg2, %arg1 : i32, i32
  }
  func.func @transform_2(%arg0: i32, %arg1: i32, %arg2: i32) -> (i32, i32) {
    %c0_i32 = arith.constant 0 : i32
    %c0_i32_0 = arith.constant 0 : i32
    return %c0_i32, %arg1 : i32, i32
  }
  func.func @transform_3(%arg0: i32, %arg1: i32, %arg2: i32) -> (i32, i32) {
    %c0_i32 = arith.constant 0 : i32
    return %arg0, %arg1 : i32, i32
  }
}

</mosaic_0001>

<llo_original>
// kernel: tpu_custom_call.1
$region0: #{tpu_custom_call.1}
  #allocation0 [shape = 'u32[]', space=smem, size = 0x4, offset = 0x4, fixed_abs, tag = 'smem constant byte address 0x4 - core index']
  #allocation1 [shape = 'u32[144,128]{1,0:T(1,128)}', space=vmem, size = 0x12000, scoped, tag = 'internal scratch']
  #allocation2 [shape = 'f32[256,128]{1,0:T(8,128)}', space=vmem, size = 0x20000, scoped, tag = 'scratch operand']
  %s0 = inlined_call_operand.hbm [shape: bf16[512,128], index: 0, kind: input, shape index: {}]
  %s1 = inlined_call_operand.hbm [shape: bf16[128,384], index: 1, kind: input, shape index: {}]
  %s2 = inlined_call_operand.vmem [shape: f32[1,384], index: 2, kind: input, shape index: {}]
  %s3 = inlined_call_operand.hbm [shape: bf16[512,384], index: 3, kind: output, shape index: {}]
  %s4 = sld [smem:[#allocation0]]
  $region61: #{tpu_custom_call.1} parent=0
    _
  %s6 = ssub.s32 1, %s4
  %s7 = scalar_select 0, %s6, %s4
  $region1: #{tpu_custom_call.1} parent=0
    #allocation3 [shape = 'u8[131072]{0}', space=vmem, size = 0x20000, scoped, tag = 'input window, operand 0']
    #allocation4 [shape = 's32[2]{0}', space=sflag, size = 0x8, scoped, tag = 'scoped memory for tpu_custom_call.1']
    #allocation5 [shape = 's32[2]{0}', space=sflag, size = 0x8, scoped, tag = 'scoped memory for tpu_custom_call.1']
    #allocation6 [shape = 'u8[65536]{0}', space=vmem, size = 0x10000, scoped, tag = 'input window, operand 1']
    #allocation7 [shape = 's32[2]{0}', space=sflag, size = 0x8, scoped, tag = 'scoped memory for tpu_custom_call.1']
    #allocation8 [shape = 'u8[131072]{0}', space=vmem, size = 0x20000, scoped, tag = 'output window, operand 0']
    %8 = vsyncpa [#allocation4], 0
    %s9 = scalar_lea.sflag [#allocation4], 1
    %10 = vsyncpa %s9, 0
    %11 = vsyncpa [#allocation7], 0
    %s12 = scalar_lea.sflag [#allocation7], 1
    %13 = vsyncpa %s12, 0
    %14 = vsyncpa [#allocation5], 0
    %s15 = scalar_lea.sflag [#allocation5], 1
    %16 = vsyncpa %s15, 0
    loop: start=0, step=1, limit=8
    $region2: #{tpu_custom_call.1} parent=1 // loop_pre_header
      _
    $region3: #{tpu_custom_call.1} parent=1 // loop_header
      %s18 = sphi 0, %s22
      %p19 = scmp.ge.s32.totalorder %s18, 8
      %s25 = sphi 0, %s44
      %s26 = sphi 0, %s40
      %s27 = sphi 0, %s36
      %s28 = sphi 0, %s25
      %s29 = sphi 0, %s26
      %s30 = sphi 0, %s27
      %s31 = sphi 0, %s28
      %s32 = sphi 0, %s29
      %s33 = sphi 0, %s30
      %s49 = sphi 0, %s51
      %s52 = sphi 0, %s49
      %s53 = sphi 0, %s52
      %s69 = sphi 0, %s53
      %s77 = sphi 0, %s79
      %s80 = sphi 0, %s77
      %s81 = sphi 0, %s80
      %s97 = sphi 0, %s81
      %s103 = sphi 0, %s105
      %s106 = sphi 0, %s103
      %s107 = sphi 0, %s106
      %s123 = sphi 0, %s107
      %s131 = sphi 0, %s133
      %s134 = sphi 0, %s131
      %s135 = sphi 0, %s134
      %s151 = sphi 0, %s135
    $region4: #{tpu_custom_call.1} parent=1 // loop_header_branch
      %21 = sbr.rel (%p19) target = $region8
    $region5: #{tpu_custom_call.1} parent=1 // loop_body
      %s23 = ssub.s32 %s18, 1
      %s24 = ssub.s32 %s18, 2
      %s34 = sadd.s32 1, %s27
      %p35 = scmp.ge.s32.totalorder %s34, 1
      %s36 = scalar_select %p35, 0, %s34
      %s37 = sadd.s32 1, %s26
      %s38 = scalar_select %p35, %s37, %s26
      %p39 = scmp.ge.s32.totalorder %s38, 3
      %s40 = scalar_select %p39, 0, %s38
      %s41 = sadd.s32 1, %s25
      %s42 = scalar_select %p39, %s41, %s25
      %p43 = scmp.ge.s32.totalorder %s42, 2
      %s44 = scalar_select %p43, 0, %s42
      %s45 = ssub.s32 %s25, %s44
      %s46 = ssub.s32 %s27, %s36
      %s47 = sor.u32 %s45, %s46
      %p48 = scmp.eq.s32.totalorder %s47, 0
      %s50 = sadd.s32 %s49, 1
      %s51 = scalar_select %p48, %s49, %s50
      %p54 = pneg %p48
      %p55 = scmp.eq.s32.totalorder %s18, 5
      %p56 = por %p54, %p55
      %p57 = scmp.ne.s32.totalorder %s49, %s52
      %p58 = scmp.eq.s32.totalorder %s18, 0
      %p59 = por %p57, %p58
      %p60 = scmp.ne.s32.totalorder %s49, %s52
      %p61 = scmp.eq.s32.totalorder %s23, 5
      %p62 = por %p60, %p61
      %p63 = scmp.ne.s32.totalorder %s52, %s53
      %p64 = scmp.eq.s32.totalorder %s23, 0
      %p65 = por %p63, %p64
      %p66 = scmp.ne.s32.totalorder %s52, %s53
      %p67 = scmp.eq.s32.totalorder %s24, 5
      %p68 = por %p66, %p67
      %p70 = scmp.ne.s32.totalorder %s53, %s69
      %p71 = scmp.eq.s32.totalorder %s24, 0
      %p72 = por %p70, %p71
      %s73 = ssub.s32 %s27, %s36
      %s74 = ssub.s32 %s26, %s40
      %s75 = sor.u32 %s73, %s74
      %p76 = scmp.eq.s32.totalorder %s75, 0
      %s78 = sadd.s32 %s77, 1
      %s79 = scalar_select %p76, %s77, %s78
      %p82 = pneg %p76
      %p83 = scmp.eq.s32.totalorder %s18, 5
      %p84 = por %p82, %p83
      %p85 = scmp.ne.s32.totalorder %s77, %s80
      %p86 = scmp.eq.s32.totalorder %s18, 0
      %p87 = por %p85, %p86
      %p88 = scmp.ne.s32.totalorder %s77, %s80
      %p89 = scmp.eq.s32.totalorder %s23, 5
      %p90 = por %p88, %p89
      %p91 = scmp.ne.s32.totalorder %s80, %s81
      %p92 = scmp.eq.s32.totalorder %s23, 0
      %p93 = por %p91, %p92
      %p94 = scmp.ne.s32.totalorder %s80, %s81
      %p95 = scmp.eq.s32.totalorder %s24, 5
      %p96 = por %p94, %p95
      %p98 = scmp.ne.s32.totalorder %s81, %s97
      %p99 = scmp.eq.s32.totalorder %s24, 0
      %p100 = por %p98, %p99
      %s101 = ssub.s32 %s26, %s40
      %p102 = scmp.eq.s32.totalorder %s101, 0
      %s104 = sadd.s32 %s103, 1
      %s105 = scalar_select %p102, %s103, %s104
      %p108 = pneg %p102
      %p109 = scmp.eq.s32.totalorder %s18, 5
      %p110 = por %p108, %p109
      %p111 = scmp.ne.s32.totalorder %s103, %s106
      %p112 = scmp.eq.s32.totalorder %s18, 0
      %p113 = por %p111, %p112
      %p114 = scmp.ne.s32.totalorder %s103, %s106
      %p115 = scmp.eq.s32.totalorder %s23, 5
      %p116 = por %p114, %p115
      %p117 = scmp.ne.s32.totalorder %s106, %s107
      %p118 = scmp.eq.s32.totalorder %s23, 0
      %p119 = por %p117, %p118
      %p120 = scmp.ne.s32.totalorder %s106, %s107
      %p121 = scmp.eq.s32.totalorder %s24, 5
      %p122 = por %p120, %p121
      %p124 = scmp.ne.s32.totalorder %s107, %s123
      %p125 = scmp.eq.s32.totalorder %s24, 0
      %p126 = por %p124, %p125
      %s127 = ssub.s32 %s25, %s44
      %s128 = ssub.s32 %s26, %s40
      %s129 = sor.u32 %s127, %s128
      %p130 = scmp.eq.s32.totalorder %s129, 0
      %s132 = sadd.s32 %s131, 1
      %s133 = scalar_select %p130, %s131, %s132
      %p136 = pneg %p130
      %p137 = scmp.eq.s32.totalorder %s18, 5
      %p138 = por %p136, %p137
      %p139 = scmp.ne.s32.totalorder %s131, %s134
      %p140 = scmp.eq.s32.totalorder %s18, 0
      %p141 = por %p139, %p140
      %p142 = scmp.ne.s32.totalorder %s131, %s134
      %p143 = scmp.eq.s32.totalorder %s23, 5
      %p144 = por %p142, %p143
      %p145 = scmp.ne.s32.totalorder %s134, %s135
      %p146 = scmp.eq.s32.totalorder %s23, 0
      %p147 = por %p145, %p146
      %p148 = scmp.ne.s32.totalorder %s134, %s135
      %p149 = scmp.eq.s32.totalorder %s24, 5
      %p150 = por %p148, %p149
      %p152 = scmp.ne.s32.totalorder %s135, %s151
      %p153 = scmp.eq.s32.totalorder %s24, 0
      %p154 = por %p152, %p153
      %p155 = scmp.le.s32.totalorder 1, %s18
      %p156 = scmp.lt.s32.totalorder %s18, 7
      %p157 = pnand %p155, %p156
      %p158 = pneg %p157
      // Predicated region
      $region9: #{tpu_custom_call.1} parent=5 // pred_check
        _
      $region10: #{tpu_custom_call.1} parent=5 // pred_check_branch
        %160 = sbr.rel (%p157) target = $region12
      $region11: #{tpu_custom_call.1} parent=5 // pred_region
        %s161 = ssub.s32 %s18, 1
      $region12: #{tpu_custom_call.1} parent=5 // pred_fallthru
        _
      %p162 = scmp.lt.s32.totalorder %s18, 6
      // Predicated region
      $region13: #{tpu_custom_call.1} parent=5 // pred_check
        %p163 = pneg %p162
      $region14: #{tpu_custom_call.1} parent=5 // pred_check_branch
        %165 = sbr.rel (%p163) target = $region16
      $region15: #{tpu_custom_call.1} parent=5 // pred_region
        // Predicated region
        $region17: #{tpu_custom_call.1} parent=15 // pred_check
          %p166 = pneg %p59
        $region18: #{tpu_custom_call.1} parent=15 // pred_check_branch
          %168 = sbr.rel (%p166) target = $region20
        $region19: #{tpu_custom_call.1} parent=15 // pred_region
          %s169 = sand.u32 %s49, 1
          %s170 = scalar_lea.sflag [#allocation4], %s169
          %s171 = sand.u32 %s49, 1
          %s172 = smul.addr %s171, 128
          %s173 = scalar_lea.vmem [#allocation3], %s172
          %s174 = smul.u32 32, %s25
          %s176 = ssub.s32 2048, 2048
          %177 = vsyncadd %s170, %s176
          %s178 = sadd.s32 %s27, %s174
          %s179 = smul.addr %s178, 64
          %s180 = scalar_lea.hbm %s0, %s179
          %s181 = sshll.u32 %s173, 4
          %s182 = int_to_ptr.vmem [resolvable:$true] %s181
          %187 = dma.hbm_to_vmem [thread:$0]  %s180, 2048, %s182, %s170, 64, 64, 4
        $region20: #{tpu_custom_call.1} parent=15 // pred_fallthru
          _
        // Predicated region
        $region21: #{tpu_custom_call.1} parent=15 // pred_check
          %p188 = pneg %p87
        $region22: #{tpu_custom_call.1} parent=15 // pred_check_branch
          %190 = sbr.rel (%p188) target = $region24
        $region23: #{tpu_custom_call.1} parent=15 // pred_region
          %s191 = sand.u32 %s77, 1
          %s192 = scalar_lea.sflag [#allocation7], %s191
          %s193 = sand.u32 %s77, 1
          %s194 = smul.addr %s193, 64
          %s195 = scalar_lea.vmem [#allocation6], %s194
          %s196 = smul.u32 16, %s27
          %s198 = ssub.s32 1024, 1024
          %199 = vsyncadd %s192, %s198
          %s200 = smul.addr %s196, 3
          %s201 = sadd.s32 %s26, %s200
          %s202 = smul.addr %s201, 64
          %s203 = scalar_lea.hbm %s1, %s202
          %s204 = sshll.u32 %s195, 4
          %s205 = int_to_ptr.vmem [resolvable:$true] %s204
          %210 = dma.hbm_to_vmem [thread:$0]  %s203, 1024, %s205, %s192, 192, 64, 4
        $region24: #{tpu_custom_call.1} parent=15 // pred_fallthru
          _
        // Predicated region
        $region25: #{tpu_custom_call.1} parent=15 // pred_check
          %p211 = pneg %p113
        $region26: #{tpu_custom_call.1} parent=15 // pred_check_branch
          %213 = sbr.rel (%p211) target = $region28
        $region27: #{tpu_custom_call.1} parent=15 // pred_region
          %p214 = scmp.lt.s32.totalorder %s26, 2
          %s215 = scalar_select %p214, %s26, 2
          %s216 = scalar_lea.vmem %s2, %s215
        $region28: #{tpu_custom_call.1} parent=15 // pred_fallthru
          _
      $region16: #{tpu_custom_call.1} parent=5 // pred_fallthru
        _
      %p217 = scmp.le.s32.totalorder 1, %s18
      %p218 = scmp.lt.s32.totalorder %s18, 7
      %p219 = pnand %p217, %p218
      %p220 = pneg %p219
      // Predicated region
      $region29: #{tpu_custom_call.1} parent=5 // pred_check
        _
      $region30: #{tpu_custom_call.1} parent=5 // pred_check_branch
        %222 = sbr.rel (%p219) target = $region32
      $region31: #{tpu_custom_call.1} parent=5 // pred_region
        %s223 = ssub.s32 %s18, 1
        %s224 = sand.u32 %s52, 1
        %s225 = scalar_lea.sflag [#allocation4], %s224
        %s226 = sand.u32 %s52, 1
        %s227 = smul.addr %s226, 128
        %s228 = scalar_lea.vmem [#allocation3], %s227
        // Predicated region
        $region33: #{tpu_custom_call.1} parent=31 // pred_check
          %p229 = pneg %p65
        $region34: #{tpu_custom_call.1} parent=31 // pred_check_branch
          %231 = sbr.rel (%p229) target = $region36
        $region35: #{tpu_custom_call.1} parent=31 // pred_region
          %232 = dma.done %s225, 2048
        $region36: #{tpu_custom_call.1} parent=31 // pred_fallthru
          _
        %s233 = sand.u32 %s80, 1
        %s234 = scalar_lea.sflag [#allocation7], %s233
        %s235 = sand.u32 %s80, 1
        %s236 = smul.addr %s235, 64
        %s237 = scalar_lea.vmem [#allocation6], %s236
        // Predicated region
        $region37: #{tpu_custom_call.1} parent=31 // pred_check
          %p238 = pneg %p93
        $region38: #{tpu_custom_call.1} parent=31 // pred_check_branch
          %240 = sbr.rel (%p238) target = $region40
        $region39: #{tpu_custom_call.1} parent=31 // pred_region
          %241 = dma.done %s234, 1024
        $region40: #{tpu_custom_call.1} parent=31 // pred_fallthru
          _
        %s242 = sand.u32 %s52, 1
        %s243 = scalar_lea.sflag [#allocation4], %s242
        %s244 = sand.u32 %s52, 1
        %s245 = smul.addr %s244, 128
        %s246 = scalar_lea.vmem [#allocation3], %s245
        %p247 = pneg %p65
        %p248 = pneg %p62
        %s249 = sand.u32 %s80, 1
        %s250 = scalar_lea.sflag [#allocation7], %s249
        %s251 = sand.u32 %s80, 1
        %s252 = smul.addr %s251, 64
        %s253 = scalar_lea.vmem [#allocation6], %s252
        %p254 = pneg %p93
        %p255 = pneg %p90
        %p256 = scmp.lt.s32.totalorder %s29, 2
        %s257 = scalar_select %p256, %s29, 2
        %s258 = scalar_lea.vmem %s2, %s257
        %p259 = pneg %p119
        %p260 = pneg %p116
        %p261 = pneg %p147
        %p262 = pneg %p144
        %s263 = sand.u32 %s134, 1
        %s264 = scalar_lea.sflag [#allocation5], %s263
        %s265 = sand.u32 %s134, 1
        %s266 = smul.addr %s265, 128
        %s267 = scalar_lea.vmem [#allocation8], %s266
        %s268 = smul.u32 32, %s28
        %s269 = smul.u32 16, %s30
        %p270 = scmp.lt.s32.totalorder %s29, 2
        %s271 = scalar_select %p270, %s29, 2
        %s272 = scalar_lea.vmem %s2, %s271
        %s273 = smul.u32 32, %s28
        %p275 = scmp.eq.s32.totalorder %s30, 0
        // Predicated region
        $region41: #{tpu_custom_call.1} parent=31 // pred_check
          %p276 = pneg %p275
        $region42: #{tpu_custom_call.1} parent=31 // pred_check_branch
          %278 = sbr.rel (%p276) target = $region44
        $region43: #{tpu_custom_call.1} parent=31 // pred_region
          %279 = vst [vmem:[#allocation2] sm:$0xff] 0.0
          %280 = vst [vmem:[#allocation2 + $0x8] sm:$0xff] 0.0
          %281 = vst [vmem:[#allocation2 + $0x10] sm:$0xff] 0.0
          %282 = vst [vmem:[#allocation2 + $0x18] sm:$0xff] 0.0
          %283 = vst [vmem:[#allocation2 + $0x20] sm:$0xff] 0.0
          %284 = vst [vmem:[#allocation2 + $0x28] sm:$0xff] 0.0
          %285 = vst [vmem:[#allocation2 + $0x30] sm:$0xff] 0.0
          %286 = vst [vmem:[#allocation2 + $0x38] sm:$0xff] 0.0
          %287 = vst [vmem:[#allocation2 + $0x40] sm:$0xff] 0.0
          %288 = vst [vmem:[#allocation2 + $0x48] sm:$0xff] 0.0
          %289 = vst [vmem:[#allocation2 + $0x50] sm:$0xff] 0.0
          %290 = vst [vmem:[#allocation2 + $0x58] sm:$0xff] 0.0
          %291 = vst [vmem:[#allocation2 + $0x60] sm:$0xff] 0.0
          %292 = vst [vmem:[#allocation2 + $0x68] sm:$0xff] 0.0
          %293 = vst [vmem:[#allocation2 + $0x70] sm:$0xff] 0.0
          %294 = vst [vmem:[#allocation2 + $0x78] sm:$0xff] 0.0
          %295 = vst [vmem:[#allocation2 + $0x80] sm:$0xff] 0.0
          %296 = vst [vmem:[#allocation2 + $0x88] sm:$0xff] 0.0
          %297 = vst [vmem:[#allocation2 + $0x90] sm:$0xff] 0.0
          %298 = vst [vmem:[#allocation2 + $0x98] sm:$0xff] 0.0
          %299 = vst [vmem:[#allocation2 + $0xa0] sm:$0xff] 0.0
          %300 = vst [vmem:[#allocation2 + $0xa8] sm:$0xff] 0.0
          %301 = vst [vmem:[#allocation2 + $0xb0] sm:$0xff] 0.0
          %302 = vst [vmem:[#allocation2 + $0xb8] sm:$0xff] 0.0
          %303 = vst [vmem:[#allocation2 + $0xc0] sm:$0xff] 0.0
          %304 = vst [vmem:[#allocation2 + $0xc8] sm:$0xff] 0.0
          %305 = vst [vmem:[#allocation2 + $0xd0] sm:$0xff] 0.0
          %306 = vst [vmem:[#allocation2 + $0xd8] sm:$0xff] 0.0
          %307 = vst [vmem:[#allocation2 + $0xe0] sm:$0xff] 0.0
          %308 = vst [vmem:[#allocation2 + $0xe8] sm:$0xff] 0.0
          %309 = vst [vmem:[#allocation2 + $0xf0] sm:$0xff] 0.0
          %310 = vst [vmem:[#allocation2 + $0xf8] sm:$0xff] 0.0
        $region44: #{tpu_custom_call.1} parent=31 // pred_fallthru
          _
        %v311 = vld [vmem:[#allocation2] sm:$0xff]
        %v312 = vld [vmem:[#allocation2 + $0x8] sm:$0xff]
        %v313 = vld [vmem:[#allocation2 + $0x10] sm:$0xff]
        %v314 = vld [vmem:[#allocation2 + $0x18] sm:$0xff]
        %v315 = vld [vmem:[#allocation2 + $0x20] sm:$0xff]
        %v316 = vld [vmem:[#allocation2 + $0x28] sm:$0xff]
        %v317 = vld [vmem:[#allocation2 + $0x30] sm:$0xff]
        %v318 = vld [vmem:[#allocation2 + $0x38] sm:$0xff]
        %v319 = vld [vmem:[#allocation2 + $0x40] sm:$0xff]
        %v320 = vld [vmem:[#allocation2 + $0x48] sm:$0xff]
        %v321 = vld [vmem:[#allocation2 + $0x50] sm:$0xff]
        %v322 = vld [vmem:[#allocation2 + $0x58] sm:$0xff]
        %v323 = vld [vmem:[#allocation2 + $0x60] sm:$0xff]
        %v324 = vld [vmem:[#allocation2 + $0x68] sm:$0xff]
        %v325 = vld [vmem:[#allocation2 + $0x70] sm:$0xff]
        %v326 = vld [vmem:[#allocation2 + $0x78] sm:$0xff]
        %v327 = vld [vmem:[#allocation2 + $0x80] sm:$0xff]
        %v328 = vld [vmem:[#allocation2 + $0x88] sm:$0xff]
        %v329 = vld [vmem:[#allocation2 + $0x90] sm:$0xff]
        %v330 = vld [vmem:[#allocation2 + $0x98] sm:$0xff]
        %v331 = vld [vmem:[#allocation2 + $0xa0] sm:$0xff]
        %v332 = vld [vmem:[#allocation2 + $0xa8] sm:$0xff]
        %v333 = vld [vmem:[#allocation2 + $0xb0] sm:$0xff]
        %v334 = vld [vmem:[#allocation2 + $0xb8] sm:$0xff]
        %v335 = vld [vmem:[#allocation2 + $0xc0] sm:$0xff]
        %v336 = vld [vmem:[#allocation2 + $0xc8] sm:$0xff]
        %v337 = vld [vmem:[#allocation2 + $0xd0] sm:$0xff]
        %v338 = vld [vmem:[#allocation2 + $0xd8] sm:$0xff]
        %v339 = vld [vmem:[#allocation2 + $0xe0] sm:$0xff]
        %v340 = vld [vmem:[#allocation2 + $0xe8] sm:$0xff]
        %v341 = vld [vmem:[#allocation2 + $0xf0] sm:$0xff]
        %v342 = vld [vmem:[#allocation2 + $0xf8] sm:$0xff]
        %v343 = vld [vmem:[%s228] sm:$0xf]
        %v344 = vld [vmem:[%s228 + $0x4] sm:$0xf]
        %v345 = vld [vmem:[%s228 + $0x8] sm:$0xf]
        %v346 = vld [vmem:[%s228 + $0xc] sm:$0xf]
        %v347 = vld [vmem:[%s228 + $0x10] sm:$0xf]
        %v348 = vld [vmem:[%s228 + $0x14] sm:$0xf]
        %v349 = vld [vmem:[%s228 + $0x18] sm:$0xf]
        %v350 = vld [vmem:[%s228 + $0x1c] sm:$0xf]
        %v351 = vld [vmem:[%s228 + $0x20] sm:$0xf]
        %v352 = vld [vmem:[%s228 + $0x24] sm:$0xf]
        %v353 = vld [vmem:[%s228 + $0x28] sm:$0xf]
        %v354 = vld [vmem:[%s228 + $0x2c] sm:$0xf]
        %v355 = vld [vmem:[%s228 + $0x30] sm:$0xf]
        %v356 = vld [vmem:[%s228 + $0x34] sm:$0xf]
        %v357 = vld [vmem:[%s228 + $0x38] sm:$0xf]
        %v358 = vld [vmem:[%s228 + $0x3c] sm:$0xf]
        %v359 = vld [vmem:[%s228 + $0x40] sm:$0xf]
        %v360 = vld [vmem:[%s228 + $0x44] sm:$0xf]
        %v361 = vld [vmem:[%s228 + $0x48] sm:$0xf]
        %v362 = vld [vmem:[%s228 + $0x4c] sm:$0xf]
        %v363 = vld [vmem:[%s228 + $0x50] sm:$0xf]
        %v364 = vld [vmem:[%s228 + $0x54] sm:$0xf]
        %v365 = vld [vmem:[%s228 + $0x58] sm:$0xf]
        %v366 = vld [vmem:[%s228 + $0x5c] sm:$0xf]
        %v367 = vld [vmem:[%s228 + $0x60] sm:$0xf]
        %v368 = vld [vmem:[%s228 + $0x64] sm:$0xf]
        %v369 = vld [vmem:[%s228 + $0x68] sm:$0xf]
        %v370 = vld [vmem:[%s228 + $0x6c] sm:$0xf]
        %v371 = vld [vmem:[%s228 + $0x70] sm:$0xf]
        %v372 = vld [vmem:[%s228 + $0x74] sm:$0xf]
        %v373 = vld [vmem:[%s228 + $0x78] sm:$0xf]
        %v374 = vld [vmem:[%s228 + $0x7c] sm:$0xf]
        %v375 = vld [vmem:[%s237] sm:$0xf]
        %v376 = vld [vmem:[%s237 + $0x4] sm:$0xf]
        %v377 = vld [vmem:[%s237 + $0x8] sm:$0xf]
        %v378 = vld [vmem:[%s237 + $0xc] sm:$0xf]
        %v379 = vld [vmem:[%s237 + $0x10] sm:$0xf]
        %v380 = vld [vmem:[%s237 + $0x14] sm:$0xf]
        %v381 = vld [vmem:[%s237 + $0x18] sm:$0xf]
        %v382 = vld [vmem:[%s237 + $0x1c] sm:$0xf]
        %v383 = vld [vmem:[%s237 + $0x20] sm:$0xf]
        %v384 = vld [vmem:[%s237 + $0x24] sm:$0xf]
        %v385 = vld [vmem:[%s237 + $0x28] sm:$0xf]
        %v386 = vld [vmem:[%s237 + $0x2c] sm:$0xf]
        %v387 = vld [vmem:[%s237 + $0x30] sm:$0xf]
        %v388 = vld [vmem:[%s237 + $0x34] sm:$0xf]
        %v389 = vld [vmem:[%s237 + $0x38] sm:$0xf]
        %v390 = vld [vmem:[%s237 + $0x3c] sm:$0xf]
        %v423 = vunpack.c.l.b16 %v343
        %v424 = vunpack.c.l.b16 %v344
        %v425 = vunpack.c.l.b16 %v345
        %v426 = vunpack.c.l.b16 %v346
        %v427 = vunpack.c.l.b16 %v347
        %v428 = vunpack.c.l.b16 %v348
        %v429 = vunpack.c.l.b16 %v349
        %v430 = vunpack.c.l.b16 %v350
        %v431 = vunpack.c.l.b16 %v351
        %v432 = vunpack.c.l.b16 %v352
        %v433 = vunpack.c.l.b16 %v353
        %v434 = vunpack.c.l.b16 %v354
        %v435 = vunpack.c.l.b16 %v355
        %v436 = vunpack.c.l.b16 %v356
        %v437 = vunpack.c.l.b16 %v357
        %v438 = vunpack.c.l.b16 %v358
        %v439 = vunpack.c.l.b16 %v359
        %v440 = vunpack.c.l.b16 %v360
        %v441 = vunpack.c.l.b16 %v361
        %v442 = vunpack.c.l.b16 %v362
        %v443 = vunpack.c.l.b16 %v363
        %v444 = vunpack.c.l.b16 %v364
        %v445 = vunpack.c.l.b16 %v365
        %v446 = vunpack.c.l.b16 %v366
        %v447 = vunpack.c.l.b16 %v367
        %v448 = vunpack.c.l.b16 %v368
        %v449 = vunpack.c.l.b16 %v369
        %v450 = vunpack.c.l.b16 %v370
        %v451 = vunpack.c.l.b16 %v371
        %v452 = vunpack.c.l.b16 %v372
        %v453 = vunpack.c.l.b16 %v373
        %v454 = vunpack.c.l.b16 %v374
        %v455 = vpack.c.b16 %v424, %v423
        %v456 = vpack.c.b16 %v426, %v425
        %v457 = vpack.c.b16 %v428, %v427
        %v458 = vpack.c.b16 %v430, %v429
        %v459 = vpack.c.b16 %v432, %v431
        %v460 = vpack.c.b16 %v434, %v433
        %v461 = vpack.c.b16 %v436, %v435
        %v462 = vpack.c.b16 %v438, %v437
        %v463 = vpack.c.b16 %v440, %v439
        %v464 = vpack.c.b16 %v442, %v441
        %v465 = vpack.c.b16 %v444, %v443
        %v466 = vpack.c.b16 %v446, %v445
        %v467 = vpack.c.b16 %v448, %v447
        %v468 = vpack.c.b16 %v450, %v449
        %v469 = vpack.c.b16 %v452, %v451
        %v470 = vpack.c.b16 %v454, %v453
        %v503 = vunpack.c.l.b16 %v375
        %v504 = vunpack.c.l.b16 %v376
        %v505 = vunpack.c.l.b16 %v377
        %v506 = vunpack.c.l.b16 %v378
        %v507 = vunpack.c.l.b16 %v379
        %v508 = vunpack.c.l.b16 %v380
        %v509 = vunpack.c.l.b16 %v381
        %v510 = vunpack.c.l.b16 %v382
        %v511 = vunpack.c.l.b16 %v383
        %v512 = vunpack.c.l.b16 %v384
        %v513 = vunpack.c.l.b16 %v385
        %v514 = vunpack.c.l.b16 %v386
        %v515 = vunpack.c.l.b16 %v387
        %v516 = vunpack.c.l.b16 %v388
        %v517 = vunpack.c.l.b16 %v389
        %v518 = vunpack.c.l.b16 %v390
        %v519 = vpack.c.b16 %v504, %v503
        %v520 = vpack.c.b16 %v506, %v505
        %v521 = vpack.c.b16 %v508, %v507
        %v522 = vpack.c.b16 %v510, %v509
        %v523 = vpack.c.b16 %v512, %v511
        %v524 = vpack.c.b16 %v514, %v513
        %v525 = vpack.c.b16 %v516, %v515
        %v526 = vpack.c.b16 %v518, %v517
        %535 = vmatprep.subr.bf16.mxu0 0
        %536 = vmatpush1.bf16.msra.mxu0 %v519
        %537 = vmatprep.subr.bf16.mxu0 0
        %538 = vmatpush1.bf16.msra.mxu0 %v520
        %539 = vmatprep.subr.bf16.mxu0 0
        %540 = vmatpush1.bf16.msra.mxu0 %v521
        %541 = vmatprep.subr.bf16.mxu0 0
        %542 = vmatpush1.bf16.msra.mxu0 %v522
        %543 = vmatprep.subr.bf16.mxu0 0
        %544 = vmatpush1.bf16.msra.mxu0 %v523
        %545 = vmatprep.subr.bf16.mxu0 0
        %546 = vmatpush1.bf16.msra.mxu0 %v524
        %547 = vmatprep.subr.bf16.mxu0 0
        %548 = vmatpush1.bf16.msra.mxu0 %v525
        %549 = vmatprep.subr.bf16.mxu0 0
        %550 = vmatpush1.bf16.msra.mxu0 %v526
        %551 = vmatprep.subr.bf16.mxu0 0
        %552 = vmatpush1.bf16.msra.mxu0 0
        %553 = vmatprep.subr.bf16.mxu0 0
        %554 = vmatpush1.bf16.msra.mxu0 0
        %555 = vmatprep.subr.bf16.mxu0 0
        %556 = vmatpush1.bf16.msra.mxu0 0
        %557 = vmatprep.subr.bf16.mxu0 0
        %558 = vmatpush1.bf16.msra.mxu0 0
        %559 = vmatprep.subr.bf16.mxu0 0
        %560 = vmatpush1.bf16.msra.mxu0 0
        %561 = vmatprep.subr.bf16.mxu0 0
        %562 = vmatpush1.bf16.msra.mxu0 0
        %563 = vmatprep.subr.bf16.mxu0 0
        %564 = vmatpush1.bf16.msra.mxu0 0
        %565 = vmatprep.subr.bf16.mxu0 0
        %566 = vmatpush1.bf16.msra.mxu0 0
        %567 = vmatprep.mubr.bf16.mxu0 0
        %568 = vmatmul.mubr.bf16.gmra.mrb[0].mxu0 %v455
        %v569 = vpop.f32.mrb[0].mxu0
        %v570 = vadd.f32 0.0, %v569
        %v571 = vpop.f32.mrb[0].mxu0
        %v572 = vpop.f32.mrb[0].mxu0
        %v573 = vadd.f32 0.0, %v572
        %v574 = vpop.f32.mrb[0].mxu0
        %575 = vmatprep.mubr.bf16.mxu0 0
        %576 = vmatmul.mubr.bf16.gmra.mrb[0].mxu0 %v456
        %v577 = vpop.f32.mrb[0].mxu0
        %v578 = vadd.f32 0.0, %v577
        %v579 = vpop.f32.mrb[0].mxu0
        %v580 = vpop.f32.mrb[0].mxu0
        %v581 = vadd.f32 0.0, %v580
        %v582 = vpop.f32.mrb[0].mxu0
        %583 = vmatprep.mubr.bf16.mxu0 0
        %584 = vmatmul.mubr.bf16.gmra.mrb[0].mxu0 %v457
        %v585 = vpop.f32.mrb[0].mxu0
        %v586 = vadd.f32 0.0, %v585
        %v587 = vpop.f32.mrb[0].mxu0
        %v588 = vpop.f32.mrb[0].mxu0
        %v589 = vadd.f32 0.0, %v588
        %v590 = vpop.f32.mrb[0].mxu0
        %591 = vmatprep.mubr.bf16.mxu0 0
        %592 = vmatmul.mubr.bf16.gmra.mrb[0].mxu0 %v458
        %v593 = vpop.f32.mrb[0].mxu0
        %v594 = vadd.f32 0.0, %v593
        %v595 = vpop.f32.mrb[0].mxu0
        %v596 = vpop.f32.mrb[0].mxu0
        %v597 = vadd.f32 0.0, %v596
        %v598 = vpop.f32.mrb[0].mxu0
        %599 = vmatprep.mubr.bf16.mxu0 0
        %600 = vmatmul.mubr.bf16.gmra.mrb[0].mxu0 %v459
        %v601 = vpop.f32.mrb[0].mxu0
        %v602 = vadd.f32 0.0, %v601
        %v603 = vpop.f32.mrb[0].mxu0
        %v604 = vpop.f32.mrb[0].mxu0
        %v605 = vadd.f32 0.0, %v604
        %v606 = vpop.f32.mrb[0].mxu0
        %607 = vmatprep.mubr.bf16.mxu0 0
        %608 = vmatmul.mubr.bf16.gmra.mrb[0].mxu0 %v460
        %v609 = vpop.f32.mrb[0].mxu0
        %v610 = vadd.f32 0.0, %v609
        %v611 = vpop.f32.mrb[0].mxu0
        %v612 = vpop.f32.mrb[0].mxu0
        %v613 = vadd.f32 0.0, %v612
        %v614 = vpop.f32.mrb[0].mxu0
        %615 = vmatprep.mubr.bf16.mxu0 0
        %616 = vmatmul.mubr.bf16.gmra.mrb[0].mxu0 %v461
        %v617 = vpop.f32.mrb[0].mxu0
        %v618 = vadd.f32 0.0, %v617
        %v619 = vpop.f32.mrb[0].mxu0
        %v620 = vpop.f32.mrb[0].mxu0
        %v621 = vadd.f32 0.0, %v620
        %v622 = vpop.f32.mrb[0].mxu0
        %623 = vmatprep.mubr.bf16.mxu0 0
        %624 = vmatmul.mubr.bf16.gmra.mrb[0].mxu0 %v462
        %v625 = vpop.f32.mrb[0].mxu0
        %v626 = vadd.f32 0.0, %v625
        %v627 = vpop.f32.mrb[0].mxu0
        %v628 = vpop.f32.mrb[0].mxu0
        %v629 = vadd.f32 0.0, %v628
        %v630 = vpop.f32.mrb[0].mxu0
        %631 = vmatprep.mubr.bf16.mxu0 0
        %632 = vmatmul.mubr.bf16.gmra.mrb[0].mxu0 %v463
        %v633 = vpop.f32.mrb[0].mxu0
        %v634 = vadd.f32 0.0, %v633
        %v635 = vpop.f32.mrb[0].mxu0
        %v636 = vpop.f32.mrb[0].mxu0
        %v637 = vadd.f32 0.0, %v636
        %v638 = vpop.f32.mrb[0].mxu0
        %639 = vmatprep.mubr.bf16.mxu0 0
        %640 = vmatmul.mubr.bf16.gmra.mrb[0].mxu0 %v464
        %v641 = vpop.f32.mrb[0].mxu0
        %v642 = vadd.f32 0.0, %v641
        %v643 = vpop.f32.mrb[0].mxu0
        %v644 = vpop.f32.mrb[0].mxu0
        %v645 = vadd.f32 0.0, %v644
        %v646 = vpop.f32.mrb[0].mxu0
        %647 = vmatprep.mubr.bf16.mxu0 0
        %648 = vmatmul.mubr.bf16.gmra.mrb[0].mxu0 %v465
        %v649 = vpop.f32.mrb[0].mxu0
        %v650 = vadd.f32 0.0, %v649
        %v651 = vpop.f32.mrb[0].mxu0
        %v652 = vpop.f32.mrb[0].mxu0
        %v653 = vadd.f32 0.0, %v652
        %v654 = vpop.f32.mrb[0].mxu0
        %655 = vmatprep.mubr.bf16.mxu0 0
        %656 = vmatmul.mubr.bf16.gmra.mrb[0].mxu0 %v466
        %v657 = vpop.f32.mrb[0].mxu0
        %v658 = vadd.f32 0.0, %v657
        %v659 = vpop.f32.mrb[0].mxu0
        %v660 = vpop.f32.mrb[0].mxu0
        %v661 = vadd.f32 0.0, %v660
        %v662 = vpop.f32.mrb[0].mxu0
        %663 = vmatprep.mubr.bf16.mxu0 0
        %664 = vmatmul.mubr.bf16.gmra.mrb[0].mxu0 %v467
        %v665 = vpop.f32.mrb[0].mxu0
        %v666 = vadd.f32 0.0, %v665
        %v667 = vpop.f32.mrb[0].mxu0
        %v668 = vpop.f32.mrb[0].mxu0
        %v669 = vadd.f32 0.0, %v668
        %v670 = vpop.f32.mrb[0].mxu0
        %671 = vmatprep.mubr.bf16.mxu0 0
        %672 = vmatmul.mubr.bf16.gmra.mrb[0].mxu0 %v468
        %v673 = vpop.f32.mrb[0].mxu0
        %v674 = vadd.f32 0.0, %v673
        %v675 = vpop.f32.mrb[0].mxu0
        %v676 = vpop.f32.mrb[0].mxu0
        %v677 = vadd.f32 0.0, %v676
        %v678 = vpop.f32.mrb[0].mxu0
        %679 = vmatprep.mubr.bf16.mxu0 0
        %680 = vmatmul.mubr.bf16.gmra.mrb[0].mxu0 %v469
        %v681 = vpop.f32.mrb[0].mxu0
        %v682 = vadd.f32 0.0, %v681
        %v683 = vpop.f32.mrb[0].mxu0
        %v684 = vpop.f32.mrb[0].mxu0
        %v685 = vadd.f32 0.0, %v684
        %v686 = vpop.f32.mrb[0].mxu0
        %687 = vmatprep.mubr.bf16.mxu0 0
        %688 = vmatmul.mubr.bf16.gmra.mrb[0].mxu0 %v470
        %v689 = vpop.f32.mrb[0].mxu0
        %v690 = vadd.f32 0.0, %v689
        %v691 = vpop.f32.mrb[0].mxu0
        %v692 = vpop.f32.mrb[0].mxu0
        %v693 = vadd.f32 0.0, %v692
        %v694 = vpop.f32.mrb[0].mxu0
        %695 = vdwg.mxu0
        %v696 = vadd.f32 %v311, %v570
        %v697 = vadd.f32 %v312, %v573
        %v698 = vadd.f32 %v313, %v578
        %v699 = vadd.f32 %v314, %v581
        %v700 = vadd.f32 %v315, %v586
        %v701 = vadd.f32 %v316, %v589
        %v702 = vadd.f32 %v317, %v594
        %v703 = vadd.f32 %v318, %v597
        %v704 = vadd.f32 %v319, %v602
        %v705 = vadd.f32 %v320, %v605
        %v706 = vadd.f32 %v321, %v610
        %v707 = vadd.f32 %v322, %v613
        %v708 = vadd.f32 %v323, %v618
        %v709 = vadd.f32 %v324, %v621
        %v710 = vadd.f32 %v325, %v626
        %v711 = vadd.f32 %v326, %v629
        %v712 = vadd.f32 %v327, %v634
        %v713 = vadd.f32 %v328, %v637
        %v714 = vadd.f32 %v329, %v642
        %v715 = vadd.f32 %v330, %v645
        %v716 = vadd.f32 %v331, %v650
        %v717 = vadd.f32 %v332, %v653
        %v718 = vadd.f32 %v333, %v658
        %v719 = vadd.f32 %v334, %v661
        %v720 = vadd.f32 %v335, %v666
        %v721 = vadd.f32 %v336, %v669
        %v722 = vadd.f32 %v337, %v674
        %v723 = vadd.f32 %v338, %v677
        %v724 = vadd.f32 %v339, %v682
        %v725 = vadd.f32 %v340, %v685
        %v726 = vadd.f32 %v341, %v690
        %v727 = vadd.f32 %v342, %v693
        %728 = vst [vmem:[#allocation2] sm:$0xff] %v696
        %729 = vst [vmem:[#allocation2 + $0x8] sm:$0xff] %v697
        %730 = vst [vmem:[#allocation2 + $0x10] sm:$0xff] %v698
        %731 = vst [vmem:[#allocation2 + $0x18] sm:$0xff] %v699
        %732 = vst [vmem:[#allocation2 + $0x20] sm:$0xff] %v700
        %733 = vst [vmem:[#allocation2 + $0x28] sm:$0xff] %v701
        %734 = vst [vmem:[#allocation2 + $0x30] sm:$0xff] %v702
        %735 = vst [vmem:[#allocation2 + $0x38] sm:$0xff] %v703
        %736 = vst [vmem:[#allocation2 + $0x40] sm:$0xff] %v704
        %737 = vst [vmem:[#allocation2 + $0x48] sm:$0xff] %v705
        %738 = vst [vmem:[#allocation2 + $0x50] sm:$0xff] %v706
        %739 = vst [vmem:[#allocation2 + $0x58] sm:$0xff] %v707
        %740 = vst [vmem:[#allocation2 + $0x60] sm:$0xff] %v708
        %741 = vst [vmem:[#allocation2 + $0x68] sm:$0xff] %v709
        %742 = vst [vmem:[#allocation2 + $0x70] sm:$0xff] %v710
        %743 = vst [vmem:[#allocation2 + $0x78] sm:$0xff] %v711
        %744 = vst [vmem:[#allocation2 + $0x80] sm:$0xff] %v712
        %745 = vst [vmem:[#allocation2 + $0x88] sm:$0xff] %v713
        %746 = vst [vmem:[#allocation2 + $0x90] sm:$0xff] %v714
        %747 = vst [vmem:[#allocation2 + $0x98] sm:$0xff] %v715
        %748 = vst [vmem:[#allocation2 + $0xa0] sm:$0xff] %v716
        %749 = vst [vmem:[#allocation2 + $0xa8] sm:$0xff] %v717
        %750 = vst [vmem:[#allocation2 + $0xb0] sm:$0xff] %v718
        %751 = vst [vmem:[#allocation2 + $0xb8] sm:$0xff] %v719
        %752 = vst [vmem:[#allocation2 + $0xc0] sm:$0xff] %v720
        %753 = vst [vmem:[#allocation2 + $0xc8] sm:$0xff] %v721
        %754 = vst [vmem:[#allocation2 + $0xd0] sm:$0xff] %v722
        %755 = vst [vmem:[#allocation2 + $0xd8] sm:$0xff] %v723
        %756 = vst [vmem:[#allocation2 + $0xe0] sm:$0xff] %v724
        %757 = vst [vmem:[#allocation2 + $0xe8] sm:$0xff] %v725
        %758 = vst [vmem:[#allocation2 + $0xf0] sm:$0xff] %v726
        %759 = vst [vmem:[#allocation2 + $0xf8] sm:$0xff] %v727
        // Predicated region
        $region45: #{tpu_custom_call.1} parent=31 // pred_check
          %p760 = pneg %p275
        $region46: #{tpu_custom_call.1} parent=31 // pred_check_branch
          %762 = sbr.rel (%p760) target = $region48
        $region47: #{tpu_custom_call.1} parent=31 // pred_region
          %v763 = vld [vmem:[#allocation2] sm:$0xff]
          %v764 = vld [vmem:[#allocation2 + $0x8] sm:$0xff]
          %v765 = vld [vmem:[#allocation2 + $0x10] sm:$0xff]
          %v766 = vld [vmem:[#allocation2 + $0x18] sm:$0xff]
          %v767 = vld [vmem:[#allocation2 + $0x20] sm:$0xff]
          %v768 = vld [vmem:[#allocation2 + $0x28] sm:$0xff]
          %v769 = vld [vmem:[#allocation2 + $0x30] sm:$0xff]
          %v770 = vld [vmem:[#allocation2 + $0x38] sm:$0xff]
          %v771 = vld [vmem:[#allocation2 + $0x40] sm:$0xff]
          %v772 = vld [vmem:[#allocation2 + $0x48] sm:$0xff]
          %v773 = vld [vmem:[#allocation2 + $0x50] sm:$0xff]
          %v774 = vld [vmem:[#allocation2 + $0x58] sm:$0xff]
          %v775 = vld [vmem:[#allocation2 + $0x60] sm:$0xff]
          %v776 = vld [vmem:[#allocation2 + $0x68] sm:$0xff]
          %v777 = vld [vmem:[#allocation2 + $0x70] sm:$0xff]
          %v778 = vld [vmem:[#allocation2 + $0x78] sm:$0xff]
          %v779 = vld [vmem:[#allocation2 + $0x80] sm:$0xff]
          %v780 = vld [vmem:[#allocation2 + $0x88] sm:$0xff]
          %v781 = vld [vmem:[#allocation2 + $0x90] sm:$0xff]
          %v782 = vld [vmem:[#allocation2 + $0x98] sm:$0xff]
          %v783 = vld [vmem:[#allocation2 + $0xa0] sm:$0xff]
          %v784 = vld [vmem:[#allocation2 + $0xa8] sm:$0xff]
          %v785 = vld [vmem:[#allocation2 + $0xb0] sm:$0xff]
          %v786 = vld [vmem:[#allocation2 + $0xb8] sm:$0xff]
          %v787 = vld [vmem:[#allocation2 + $0xc0] sm:$0xff]
          %v788 = vld [vmem:[#allocation2 + $0xc8] sm:$0xff]
          %v789 = vld [vmem:[#allocation2 + $0xd0] sm:$0xff]
          %v790 = vld [vmem:[#allocation2 + $0xd8] sm:$0xff]
          %v791 = vld [vmem:[#allocation2 + $0xe0] sm:$0xff]
          %v792 = vld [vmem:[#allocation2 + $0xe8] sm:$0xff]
          %v793 = vld [vmem:[#allocation2 + $0xf0] sm:$0xff]
          %v794 = vld [vmem:[#allocation2 + $0xf8] sm:$0xff]
          %v795 = vld [vmem:[%s272] sm:$0x1]
          %v797 = vlaneseq
          %v798 = vshrl.u32 %v797, 7
          %v799 = vsub.s32 0, %v798
          %v800 = vrot.slane %v795, %v799
          %v802 = vadd.f32 %v763, %v800
          %v803 = vadd.f32 %v764, %v800
          %v804 = vadd.f32 %v765, %v800
          %v805 = vadd.f32 %v766, %v800
          %v806 = vadd.f32 %v767, %v800
          %v807 = vadd.f32 %v768, %v800
          %v808 = vadd.f32 %v769, %v800
          %v809 = vadd.f32 %v770, %v800
          %v810 = vadd.f32 %v771, %v800
          %v811 = vadd.f32 %v772, %v800
          %v812 = vadd.f32 %v773, %v800
          %v813 = vadd.f32 %v774, %v800
          %v814 = vadd.f32 %v775, %v800
          %v815 = vadd.f32 %v776, %v800
          %v816 = vadd.f32 %v777, %v800
          %v817 = vadd.f32 %v778, %v800
          %v818 = vadd.f32 %v779, %v800
          %v819 = vadd.f32 %v780, %v800
          %v820 = vadd.f32 %v781, %v800
          %v821 = vadd.f32 %v782, %v800
          %v822 = vadd.f32 %v783, %v800
          %v823 = vadd.f32 %v784, %v800
          %v824 = vadd.f32 %v785, %v800
          %v825 = vadd.f32 %v786, %v800
          %v826 = vadd.f32 %v787, %v800
          %v827 = vadd.f32 %v788, %v800
          %v828 = vadd.f32 %v789, %v800
          %v829 = vadd.f32 %v790, %v800
          %v830 = vadd.f32 %v791, %v800
          %v831 = vadd.f32 %v792, %v800
          %v832 = vadd.f32 %v793, %v800
          %v833 = vadd.f32 %v794, %v800
          %v834 = vpack.c.bf16 %v803, %v802
          %v835 = vpack.c.bf16 %v805, %v804
          %v836 = vpack.c.bf16 %v807, %v806
          %v837 = vpack.c.bf16 %v809, %v808
          %v838 = vpack.c.bf16 %v811, %v810
          %v839 = vpack.c.bf16 %v813, %v812
          %v840 = vpack.c.bf16 %v815, %v814
          %v841 = vpack.c.bf16 %v817, %v816
          %v842 = vpack.c.bf16 %v819, %v818
          %v843 = vpack.c.bf16 %v821, %v820
          %v844 = vpack.c.bf16 %v823, %v822
          %v845 = vpack.c.bf16 %v825, %v824
          %v846 = vpack.c.bf16 %v827, %v826
          %v847 = vpack.c.bf16 %v829, %v828
          %v848 = vpack.c.bf16 %v831, %v830
          %v849 = vpack.c.bf16 %v833, %v832
          %v866 = vunpack.c.l.b16 %v834
          %v867 = vunpack.c.h.b16 %v834
          %v868 = vunpack.c.l.b16 %v835
          %v869 = vunpack.c.h.b16 %v835
          %v870 = vunpack.c.l.b16 %v836
          %v871 = vunpack.c.h.b16 %v836
          %v872 = vunpack.c.l.b16 %v837
          %v873 = vunpack.c.h.b16 %v837
          %v874 = vunpack.c.l.b16 %v838
          %v875 = vunpack.c.h.b16 %v838
          %v876 = vunpack.c.l.b16 %v839
          %v877 = vunpack.c.h.b16 %v839
          %v878 = vunpack.c.l.b16 %v840
          %v879 = vunpack.c.h.b16 %v840
          %v880 = vunpack.c.l.b16 %v841
          %v881 = vunpack.c.h.b16 %v841
          %v882 = vunpack.c.l.b16 %v842
          %v883 = vunpack.c.h.b16 %v842
          %v884 = vunpack.c.l.b16 %v843
          %v885 = vunpack.c.h.b16 %v843
          %v886 = vunpack.c.l.b16 %v844
          %v887 = vunpack.c.h.b16 %v844
          %v888 = vunpack.c.l.b16 %v845
          %v889 = vunpack.c.h.b16 %v845
          %v890 = vunpack.c.l.b16 %v846
          %v891 = vunpack.c.h.b16 %v846
          %v892 = vunpack.c.l.b16 %v847
          %v893 = vunpack.c.h.b16 %v847
          %v894 = vunpack.c.l.b16 %v848
          %v895 = vunpack.c.h.b16 %v848
          %v896 = vunpack.c.l.b16 %v849
          %v897 = vunpack.c.h.b16 %v849
          %v898 = vpack.c.b16 %v866, %v866
          %v899 = vpack.c.b16 %v867, %v867
          %v900 = vpack.c.b16 %v868, %v868
          %v901 = vpack.c.b16 %v869, %v869
          %v902 = vpack.c.b16 %v870, %v870
          %v903 = vpack.c.b16 %v871, %v871
          %v904 = vpack.c.b16 %v872, %v872
          %v905 = vpack.c.b16 %v873, %v873
          %v906 = vpack.c.b16 %v874, %v874
          %v907 = vpack.c.b16 %v875, %v875
          %v908 = vpack.c.b16 %v876, %v876
          %v909 = vpack.c.b16 %v877, %v877
          %v910 = vpack.c.b16 %v878, %v878
          %v911 = vpack.c.b16 %v879, %v879
          %v912 = vpack.c.b16 %v880, %v880
          %v913 = vpack.c.b16 %v881, %v881
          %v914 = vpack.c.b16 %v882, %v882
          %v915 = vpack.c.b16 %v883, %v883
          %v916 = vpack.c.b16 %v884, %v884
          %v917 = vpack.c.b16 %v885, %v885
          %v918 = vpack.c.b16 %v886, %v886
          %v919 = vpack.c.b16 %v887, %v887
          %v920 = vpack.c.b16 %v888, %v888
          %v921 = vpack.c.b16 %v889, %v889
          %v922 = vpack.c.b16 %v890, %v890
          %v923 = vpack.c.b16 %v891, %v891
          %v924 = vpack.c.b16 %v892, %v892
          %v925 = vpack.c.b16 %v893, %v893
          %v926 = vpack.c.b16 %v894, %v894
          %v927 = vpack.c.b16 %v895, %v895
          %v928 = vpack.c.b16 %v896, %v896
          %v929 = vpack.c.b16 %v897, %v897
          %962 = vst [vmem:[%s267] sm:$0xf] %v898
          %963 = vst [vmem:[%s267 + $0x4] sm:$0xf] %v899
          %964 = vst [vmem:[%s267 + $0x8] sm:$0xf] %v900
          %965 = vst [vmem:[%s267 + $0xc] sm:$0xf] %v901
          %966 = vst [vmem:[%s267 + $0x10] sm:$0xf] %v902
          %967 = vst [vmem:[%s267 + $0x14] sm:$0xf] %v903
          %968 = vst [vmem:[%s267 + $0x18] sm:$0xf] %v904
          %969 = vst [vmem:[%s267 + $0x1c] sm:$0xf] %v905
          %970 = vst [vmem:[%s267 + $0x20] sm:$0xf] %v906
          %971 = vst [vmem:[%s267 + $0x24] sm:$0xf] %v907
          %972 = vst [vmem:[%s267 + $0x28] sm:$0xf] %v908
          %973 = vst [vmem:[%s267 + $0x2c] sm:$0xf] %v909
          %974 = vst [vmem:[%s267 + $0x30] sm:$0xf] %v910
          %975 = vst [vmem:[%s267 + $0x34] sm:$0xf] %v911
          %976 = vst [vmem:[%s267 + $0x38] sm:$0xf] %v912
          %977 = vst [vmem:[%s267 + $0x3c] sm:$0xf] %v913
          %978 = vst [vmem:[%s267 + $0x40] sm:$0xf] %v914
          %979 = vst [vmem:[%s267 + $0x44] sm:$0xf] %v915
          %980 = vst [vmem:[%s267 + $0x48] sm:$0xf] %v916
          %981 = vst [vmem:[%s267 + $0x4c] sm:$0xf] %v917
          %982 = vst [vmem:[%s267 + $0x50] sm:$0xf] %v918
          %983 = vst [vmem:[%s267 + $0x54] sm:$0xf] %v919
          %984 = vst [vmem:[%s267 + $0x58] sm:$0xf] %v920
          %985 = vst [vmem:[%s267 + $0x5c] sm:$0xf] %v921
          %986 = vst [vmem:[%s267 + $0x60] sm:$0xf] %v922
          %987 = vst [vmem:[%s267 + $0x64] sm:$0xf] %v923
          %988 = vst [vmem:[%s267 + $0x68] sm:$0xf] %v924
          %989 = vst [vmem:[%s267 + $0x6c] sm:$0xf] %v925
          %990 = vst [vmem:[%s267 + $0x70] sm:$0xf] %v926
          %991 = vst [vmem:[%s267 + $0x74] sm:$0xf] %v927
          %992 = vst [vmem:[%s267 + $0x78] sm:$0xf] %v928
          %993 = vst [vmem:[%s267 + $0x7c] sm:$0xf] %v929
        $region48: #{tpu_custom_call.1} parent=31 // pred_fallthru
          _
        %s994 = sand.u32 %s134, 1
        %s995 = scalar_lea.sflag [#allocation5], %s994
        %s996 = sand.u32 %s134, 1
        %s997 = smul.addr %s996, 128
        %s998 = scalar_lea.vmem [#allocation8], %s997
        // Predicated region
        $region49: #{tpu_custom_call.1} parent=31 // pred_check
          %p999 = pneg %p144
        $region50: #{tpu_custom_call.1} parent=31 // pred_check_branch
          %1001 = sbr.rel (%p999) target = $region52
        $region51: #{tpu_custom_call.1} parent=31 // pred_region
          %s1002 = smul.u32 32, %s28
          %s1004 = ssub.s32 2048, 2048
          %1005 = vsyncadd %s995, %s1004
          %s1006 = smul.addr %s1002, 3
          %s1007 = sadd.s32 %s29, %s1006
          %s1008 = smul.addr %s1007, 64
          %s1009 = scalar_lea.hbm %s3, %s1008
          %s1010 = sshll.u32 %s998, 4
          %s1011 = int_to_ptr.vmem [resolvable:$true] %s1010
          %1016 = dma.vmem_to_hbm [thread:$0]  %s1011, 2048, %s1009, %s995, 64, 192, 4
        $region52: #{tpu_custom_call.1} parent=31 // pred_fallthru
          _
      $region32: #{tpu_custom_call.1} parent=5 // pred_fallthru
        _
      %p1017 = scmp.le.s32.totalorder 2, %s18
      // Predicated region
      $region53: #{tpu_custom_call.1} parent=5 // pred_check
        %p1018 = pneg %p1017
      $region54: #{tpu_custom_call.1} parent=5 // pred_check_branch
        %1020 = sbr.rel (%p1018) target = $region56
      $region55: #{tpu_custom_call.1} parent=5 // pred_region
        %s1021 = ssub.s32 %s18, 2
        // Predicated region
        $region57: #{tpu_custom_call.1} parent=55 // pred_check
          %p1022 = pneg %p150
        $region58: #{tpu_custom_call.1} parent=55 // pred_check_branch
          %1024 = sbr.rel (%p1022) target = $region60
        $region59: #{tpu_custom_call.1} parent=55 // pred_region
          %s1025 = sand.u32 %s135, 1
          %s1026 = scalar_lea.sflag [#allocation5], %s1025
          %s1027 = sand.u32 %s135, 1
          %s1028 = smul.addr %s1027, 128
          %s1029 = scalar_lea.vmem [#allocation8], %s1028
          %1030 = dma.done %s1026, 2048
        $region60: #{tpu_custom_call.1} parent=55 // pred_fallthru
          _
      $region56: #{tpu_custom_call.1} parent=5 // pred_fallthru
        _
    $region6: #{tpu_custom_call.1} parent=1 // loop_footer
      %s22 = sadd.s32 1, %s18
    $region7: #{tpu_custom_call.1} parent=1 // loop_footer_branch
      %17 = sbr.rel target = $region3
    $region8: #{tpu_custom_call.1} parent=1 // loop_exit
      _
    %1031 = vsyncpa [#allocation4], 1
    %s1032 = scalar_lea.sflag [#allocation4], 1
    %1033 = vsyncpa %s1032, 1
    %1034 = vsyncpa [#allocation7], 1
    %s1035 = scalar_lea.sflag [#allocation7], 1
    %1036 = vsyncpa %s1035, 1
    %1037 = vsyncpa [#allocation5], 1
    %s1038 = scalar_lea.sflag [#allocation5], 1
    %1039 = vsyncpa %s1038, 1

</llo_original>
